<compile_context>
chip_gen: v7x
topology: tpu7x:2x2x1
jax: 0.10.0
libtpu: 0.0.40
codegen_flags: <defaults>
</compile_context>

<pallas_src>
import jax
import jax.numpy as jnp
from jax.experimental import pallas as pl
from jax.experimental.pallas import tpu as pltpu

PATCH = 4          # MaskFormer masks_queries_logits live at H/4 x W/4
NUM_QUERIES = 100  # MaskFormer num_queries
C_EMBED = 32       # synthetic mask-embedding dim


# ---------------------------------------------------------------------------
# Pallas kernel: fused (last-query mask logits -> bilinear upsample -> sigmoid)
# ---------------------------------------------------------------------------
def fused_head_upsample_kernel(bl_ref, x_ref, t_ref, wy_ref, wxt_ref, o_ref):
    """One grid step == one (image, H-tile).

    bl_ref : SMEM [1]              fused head bias  (proj_b @ mask_embed[:, -1])
    x_ref  : VMEM [1, C, h, P*W]   image rows, P*W lanes (free reshape of NCHW)
    t_ref  : VMEM [C, P*W, w]      bf16 fold matrices (patch de-interleave * wl)
    wy_ref : VMEM [TH, h]          bf16 row-interp block (align_corners=True)
    wxt_ref: VMEM [w, W]           bf16 col-interp matrix, pre-transposed
    o_ref  : VMEM [1, TH, W]       sigmoid(upsampled last-query mask)
    """
    c_in = x_ref.shape[1]
    h = x_ref.shape[2]
    w = t_ref.shape[2]

    # Channel/patch contraction on the MXU: logits land directly as [h, w].
    acc = jnp.zeros((h, w), jnp.float32)
    for c in range(c_in):                      # C = 3: tiny static unroll
        xc = x_ref[0, c].astype(jnp.bfloat16)  # [h, P*W]
        acc = acc + jnp.dot(xc, t_ref[c], preferred_element_type=jnp.float32)

    # Bilinear upsample (align_corners=True) as two MXU matmuls.
    tmp = jnp.dot(wy_ref[...], acc.astype(jnp.bfloat16),
                  preferred_element_type=jnp.float32)          # [TH, w]
    up = jnp.dot(tmp.astype(jnp.bfloat16), wxt_ref[...],
                 preferred_element_type=jnp.float32)           # [TH, W]

    # Bias after upsample is exact: bilinear rows are row-stochastic.
    o_ref[0] = jax.nn.sigmoid(up + bl_ref[0])


# ---------------------------------------------------------------------------
# Parameter init (deterministic, synthetic — no checkpoint load)
# ---------------------------------------------------------------------------
def init_params(key, c_in=3):
    k1, k2, k3, k4 = jax.random.split(key, 4)
    cp = c_in * PATCH * PATCH
    return {
        "proj_w": 0.1 * jax.random.normal(k1, (cp, C_EMBED), jnp.float32),
        "proj_b": 0.1 * jax.random.normal(k2, (1, C_EMBED), jnp.float32),
        "mask_embed": 0.1 * jax.random.normal(k3, (C_EMBED, NUM_QUERIES), jnp.float32),
        # nn.Linear(100, 1) exists in the PyTorch module but is never used in forward().
        "linear_output_w": 0.1 * jax.random.normal(k4, (NUM_QUERIES, 1), jnp.float32),
        "linear_output_b": jnp.zeros((1,), jnp.float32),
    }


def bilinear_matrix(out_size, in_size):
    """Row-stochastic matrix W with  out = W @ in  matching
    F.interpolate(mode='bilinear', align_corners=True) along one axis."""
    if out_size == 1:  # degenerate target: sample source index 0
        return jnp.zeros((1, in_size), jnp.float32).at[0, 0].set(1.0)
    if in_size == 1:
        return jnp.ones((out_size, 1), jnp.float32)
    i = jnp.arange(out_size, dtype=jnp.float32)
    src = i * (in_size - 1) / (out_size - 1)
    lo = jnp.clip(jnp.floor(src).astype(jnp.int32), 0, in_size - 2)
    frac = src - lo.astype(jnp.float32)
    w = jnp.zeros((out_size, in_size), jnp.float32)
    rows = jnp.arange(out_size)
    w = w.at[rows, lo].add(1.0 - frac)
    w = w.at[rows, lo + 1].add(frac)
    return w


# ---------------------------------------------------------------------------
# Forward
# ---------------------------------------------------------------------------
def maskformer_pretrained_forward(x, params):
    B, C_in, H, W = x.shape
    assert H % PATCH == 0 and W % PATCH == 0
    h, w = H // PATCH, W // PATCH
    PW = PATCH * W

    # Trace-time weight fusion: only the last query column is ever used.
    me_last = params["mask_embed"][:, -1]                          # [C_EMBED]
    wl = (params["proj_w"] @ me_last).astype(jnp.float32)          # [C*P*P]
    bl = (params["proj_b"][0] @ me_last).reshape((1,)).astype(jnp.float32)
    wl3 = wl.reshape(C_in, PATCH, PATCH)                           # [c, py, px]

    # Fold matrix: T[c, py*W + ww*PATCH + px, ww] = wl3[c, py, px].
    # Built without scatter: [C,P,w,P,w] outer product with eye(w), reshaped.
    eye_w = jnp.eye(w, dtype=jnp.float32)
    t_fold = (wl3[:, :, None, :, None] * eye_w[None, None, :, None, :]) \
        .reshape(C_in, PW, w).astype(jnp.bfloat16)

    # Bilinear (align_corners=True) interp matrices (bf16); Wx pre-transposed.
    wy = bilinear_matrix(H, h).astype(jnp.bfloat16)                # [H, h]
    wxt = bilinear_matrix(W, w).T.astype(jnp.bfloat16)             # [w, W]

    # Metadata-only reshape: [B,C,H,W] -> [B,C,h,PATCH*W].  No HBM traffic.
    xr = x.reshape(B, C_in, h, PW)

    # Optional H-tiling: gives both v7x TensorCores work even at B == 1 and
    # shrinks per-step blocks under the 64 MiB VMEM budget.  Single tile at
    # small H (toy case) — no wasted recompute there.
    tile_h = H // 2 if (H >= 512 and (H // 2) % 8 == 0) else H
    n_h = H // tile_h

    step_flops = (2 * C_in * h * PW * w       # fold/contraction matmuls
                  + 2 * tile_h * h * w        # Wy @ acc
                  + 2 * tile_h * w * W)       # (..) @ Wx^T
    cost = pl.CostEstimate(
        flops=int(B * n_h * step_flops),
        transcendentals=int(B * H * W),
        bytes_accessed=int(xr.size * 4 + t_fold.size * 2 + wy.size * 2
                           + wxt.size * 2 + B * H * W * 4),
    )

    x_blk_bytes = C_in * h * PW * 4
    out_blk_bytes = tile_h * W * 4
    const_bytes = (t_fold.size + wy.size + wxt.size) * 2
    vmem_limit = int(min(max(2 * (x_blk_bytes + out_blk_bytes) + const_bytes
                             + (4 << 20), 16 << 20), 64 << 20))

    up = pl.pallas_call(
        fused_head_upsample_kernel,
        out_shape=jax.ShapeDtypeStruct((B, H, W), jnp.float32),
        grid=(B, n_h),
        in_specs=[
            pl.BlockSpec(memory_space=pltpu.MemorySpace.SMEM),            # bl
            pl.BlockSpec((1, C_in, h, PW), lambda b, t: (b, 0, 0, 0)),    # x rows
            pl.BlockSpec((C_in, PW, w), lambda b, t: (0, 0, 0)),          # t_fold
            pl.BlockSpec((tile_h, h), lambda b, t: (t, 0)),               # wy tile
            pl.BlockSpec((w, W), lambda b, t: (0, 0)),                    # wxt
        ],
        out_specs=pl.BlockSpec((1, tile_h, W), lambda b, t: (b, t, 0)),
        compiler_params=pltpu.CompilerParams(
            dimension_semantics=("parallel", "parallel"),
            vmem_limit_bytes=vmem_limit),
        cost_estimate=cost,
    )(bl, xr, t_fold, wy, wxt)

    # out[:, -1].unsqueeze(1) -> interpolate -> sigmoid already done; .squeeze():
    return jnp.squeeze(up[:, None, :, :])


# ---------------------------------------------------------------------------
# Pure-JAX reference (same math, f32, no Pallas) for a correctness check
# ---------------------------------------------------------------------------
def reference_forward(x, params):
    B, C_in, H, W = x.shape
    h, w = H // PATCH, W // PATCH
    p = x.reshape(B, C_in, h, PATCH, w, PATCH).transpose(0, 2, 4, 1, 3, 5)
    p = p.reshape(B, h * w, C_in * PATCH * PATCH)
    feats = p @ params["proj_w"] + params["proj_b"]
    logits = feats @ params["mask_embed"]                          # [B, h*w, Q]
    last = logits[..., -1].reshape(B, h, w)
    wy = bilinear_matrix(H, h)
    wx = bilinear_matrix(W, w)
    up = jnp.einsum("Hh,bhw,Ww->bHW", wy, last, wx)
    return jnp.squeeze(jax.nn.sigmoid(up)[:, None])


if __name__ == "__main__":
    key = jax.random.PRNGKey(0)
    B, C_in, H, W = 2, 3, 32, 32
    x = jax.random.normal(key, (B, C_in, H, W), dtype=jnp.float32)

    params = init_params(jax.random.PRNGKey(42), c_in=C_in)
    out = maskformer_pretrained_forward(x, params)
    out = jax.block_until_ready(out)

    assert out.shape == (B, H, W), out.shape
    assert bool(jnp.all((out >= 0.0) & (out <= 1.0)))  # sigmoid range

    ref = reference_forward(x, params)
    err = float(jnp.max(jnp.abs(out - ref)))
    assert err < 2e-2, err

    print("KERNEL_OK")
</pallas_src>

<mosaic_0001>
module attributes {stable_mosaic.version = 11 : i64} {
  func.func @fused_head_upsample_kernel(%arg0: i32, %arg1: i32, %arg2: memref<1xf32, #tpu.memory_space<smem>>, %arg3: memref<1x3x8x128xf32, #tpu.memory_space<vmem>>, %arg4: memref<3x128x8xbf16, #tpu.memory_space<vmem>>, %arg5: memref<32x8xbf16, #tpu.memory_space<vmem>>, %arg6: memref<8x32xbf16, #tpu.memory_space<vmem>>, %arg7: memref<1x32x32xf32, #tpu.memory_space<vmem>>) attributes {dimension_semantics = [#tpu.dimension_semantics<parallel>, #tpu.dimension_semantics<parallel>], iteration_bounds = array<i64: 2, 1>, scalar_prefetch = 0 : i64, scratch_operands = 0 : i64, tpu.core_type = #tpu.core_type<tc>, window_params = [{transform_indices = @transform_0, window_bounds = array<i64: 1>}, {transform_indices = @transform_1, window_bounds = array<i64: 1, 3, 8, 128>}, {pipeline_mode = #tpu.pipeline_mode<synchronous>, transform_indices = @transform_2, window_bounds = array<i64: 3, 128, 8>}, {transform_indices = @transform_3, window_bounds = array<i64: 32, 8>}, {pipeline_mode = #tpu.pipeline_mode<synchronous>, transform_indices = @transform_4, window_bounds = array<i64: 8, 32>}, {transform_indices = @transform_5, window_bounds = array<i64: 1, 32, 32>}]} {
    %cst = arith.constant 0.000000e+00 : f32
    %0 = vector.broadcast %cst : f32 to vector<8x8xf32>
    %c0 = arith.constant 0 : index
    %c0_0 = arith.constant 0 : index
    %c0_1 = arith.constant 0 : index
    %c0_2 = arith.constant 0 : index
    %1 = vector.load %arg3[%c0, %c0_0, %c0_1, %c0_2] : memref<1x3x8x128xf32, #tpu.memory_space<vmem>>, vector<1x1x8x128xf32>
    %2 = vector.shape_cast %1 : vector<1x1x8x128xf32> to vector<8x128xf32>
    %3 = arith.truncf %2 : vector<8x128xf32> to vector<8x128xbf16>
    %c0_3 = arith.constant 0 : index
    %c0_4 = arith.constant 0 : index
    %c0_5 = arith.constant 0 : index
    %4 = vector.load %arg4[%c0_3, %c0_4, %c0_5] : memref<3x128x8xbf16, #tpu.memory_space<vmem>>, vector<1x128x8xbf16>
    %5 = vector.shape_cast %4 : vector<1x128x8xbf16> to vector<128x8xbf16>
    %cst_6 = arith.constant dense<0.000000e+00> : vector<8x8xf32>
    %6 = tpu.matmul %3, %5, %cst_6 {dimension_numbers = #tpu.dot_dimension_numbers<[1], [0], [0], [1], [0, 0, 1, 1], [], []>} : vector<8x128xbf16>, vector<128x8xbf16>, vector<8x8xf32> -> vector<8x8xf32>
    %7 = arith.addf %0, %6 : vector<8x8xf32>
    %c0_7 = arith.constant 0 : index
    %c1 = arith.constant 1 : index
    %c0_8 = arith.constant 0 : index
    %c0_9 = arith.constant 0 : index
    %8 = vector.load %arg3[%c0_7, %c1, %c0_8, %c0_9] : memref<1x3x8x128xf32, #tpu.memory_space<vmem>>, vector<1x1x8x128xf32>
    %9 = vector.shape_cast %8 : vector<1x1x8x128xf32> to vector<8x128xf32>
    %10 = arith.truncf %9 : vector<8x128xf32> to vector<8x128xbf16>
    %c1_10 = arith.constant 1 : index
    %c0_11 = arith.constant 0 : index
    %c0_12 = arith.constant 0 : index
    %11 = vector.load %arg4[%c1_10, %c0_11, %c0_12] : memref<3x128x8xbf16, #tpu.memory_space<vmem>>, vector<1x128x8xbf16>
    %12 = vector.shape_cast %11 : vector<1x128x8xbf16> to vector<128x8xbf16>
    %cst_13 = arith.constant dense<0.000000e+00> : vector<8x8xf32>
    %13 = tpu.matmul %10, %12, %cst_13 {dimension_numbers = #tpu.dot_dimension_numbers<[1], [0], [0], [1], [0, 0, 1, 1], [], []>} : vector<8x128xbf16>, vector<128x8xbf16>, vector<8x8xf32> -> vector<8x8xf32>
    %14 = arith.addf %7, %13 : vector<8x8xf32>
    %c0_14 = arith.constant 0 : index
    %c2 = arith.constant 2 : index
    %c0_15 = arith.constant 0 : index
    %c0_16 = arith.constant 0 : index
    %15 = vector.load %arg3[%c0_14, %c2, %c0_15, %c0_16] : memref<1x3x8x128xf32, #tpu.memory_space<vmem>>, vector<1x1x8x128xf32>
    %16 = vector.shape_cast %15 : vector<1x1x8x128xf32> to vector<8x128xf32>
    %17 = arith.truncf %16 : vector<8x128xf32> to vector<8x128xbf16>
    %c2_17 = arith.constant 2 : index
    %c0_18 = arith.constant 0 : index
    %c0_19 = arith.constant 0 : index
    %18 = vector.load %arg4[%c2_17, %c0_18, %c0_19] : memref<3x128x8xbf16, #tpu.memory_space<vmem>>, vector<1x128x8xbf16>
    %19 = vector.shape_cast %18 : vector<1x128x8xbf16> to vector<128x8xbf16>
    %cst_20 = arith.constant dense<0.000000e+00> : vector<8x8xf32>
    %20 = tpu.matmul %17, %19, %cst_20 {dimension_numbers = #tpu.dot_dimension_numbers<[1], [0], [0], [1], [0, 0, 1, 1], [], []>} : vector<8x128xbf16>, vector<128x8xbf16>, vector<8x8xf32> -> vector<8x8xf32>
    %21 = arith.addf %14, %20 : vector<8x8xf32>
    %c0_21 = arith.constant 0 : index
    %c0_22 = arith.constant 0 : index
    %22 = vector.load %arg5[%c0_21, %c0_22] : memref<32x8xbf16, #tpu.memory_space<vmem>>, vector<32x8xbf16>
    %23 = arith.truncf %21 : vector<8x8xf32> to vector<8x8xbf16>
    %cst_23 = arith.constant dense<0.000000e+00> : vector<32x8xf32>
    %24 = tpu.matmul %22, %23, %cst_23 {dimension_numbers = #tpu.dot_dimension_numbers<[1], [0], [0], [1], [0, 0, 1, 1], [], []>} : vector<32x8xbf16>, vector<8x8xbf16>, vector<32x8xf32> -> vector<32x8xf32>
    %25 = arith.truncf %24 : vector<32x8xf32> to vector<32x8xbf16>
    %c0_24 = arith.constant 0 : index
    %c0_25 = arith.constant 0 : index
    %26 = vector.load %arg6[%c0_24, %c0_25] : memref<8x32xbf16, #tpu.memory_space<vmem>>, vector<8x32xbf16>
    %cst_26 = arith.constant dense<0.000000e+00> : vector<32x32xf32>
    %27 = tpu.matmul %25, %26, %cst_26 {dimension_numbers = #tpu.dot_dimension_numbers<[1], [0], [0], [1], [0, 0, 1, 1], [], []>} : vector<32x8xbf16>, vector<8x32xbf16>, vector<32x32xf32> -> vector<32x32xf32>
    %c0_27 = arith.constant 0 : index
    %28 = memref.load %arg2[%c0_27] : memref<1xf32, #tpu.memory_space<smem>>
    %29 = vector.broadcast %28 : f32 to vector<32x32xf32>
    %30 = arith.addf %27, %29 : vector<32x32xf32>
    %31 = arith.negf %30 : vector<32x32xf32>
    %32 = math.exp %31 : vector<32x32xf32>
    %cst_28 = arith.constant 1.000000e+00 : f32
    %33 = vector.broadcast %cst_28 : f32 to vector<32x32xf32>
    %34 = arith.addf %33, %32 : vector<32x32xf32>
    %35 = arith.divf %33, %34 : vector<32x32xf32>
    %c0_29 = arith.constant 0 : index
    %c0_30 = arith.constant 0 : index
    %c0_31 = arith.constant 0 : index
    %36 = vector.load %arg7[%c0_29, %c0_30, %c0_31] : memref<1x32x32xf32, #tpu.memory_space<vmem>>, vector<1x32x32xf32>
    %37 = vector.shape_cast %36 : vector<1x32x32xf32> to vector<32x32xf32>
    %38 = vector.shape_cast %35 : vector<32x32xf32> to vector<1x32x32xf32>
    tpu.vector_store %arg7[%c0_29, %c0_30, %c0_31], %38 {strides = array<i32>} : memref<1x32x32xf32, #tpu.memory_space<vmem>>, vector<1x32x32xf32>,
    return
  }
  func.func @transform_0(%arg0: i32, %arg1: i32) -> i32 {
    %c0_i32 = arith.constant 0 : i32
    %c0_i32_0 = arith.constant 0 : i32
    return %c0_i32 : i32
  }
  func.func @transform_1(%arg0: i32, %arg1: i32) -> (i32, i32, i32, i32) {
    %c0_i32 = arith.constant 0 : i32
    %c0_i32_0 = arith.constant 0 : i32
    %c0_i32_1 = arith.constant 0 : i32
    %c0_i32_2 = arith.constant 0 : i32
    return %arg0, %c0_i32, %c0_i32_0, %c0_i32_1 : i32, i32, i32, i32
  }
  func.func @transform_2(%arg0: i32, %arg1: i32) -> (i32, i32, i32) {
    %c0_i32 = arith.constant 0 : i32
    %c0_i32_0 = arith.constant 0 : i32
    %c0_i32_1 = arith.constant 0 : i32
    %c0_i32_2 = arith.constant 0 : i32
    return %c0_i32, %c0_i32_0, %c0_i32_1 : i32, i32, i32
  }
  func.func @transform_3(%arg0: i32, %arg1: i32) -> (i32, i32) {
    %c0_i32 = arith.constant 0 : i32
    %c0_i32_0 = arith.constant 0 : i32
    return %arg1, %c0_i32 : i32, i32
  }
  func.func @transform_4(%arg0: i32, %arg1: i32) -> (i32, i32) {
    %c0_i32 = arith.constant 0 : i32
    %c0_i32_0 = arith.constant 0 : i32
    %c0_i32_1 = arith.constant 0 : i32
    return %c0_i32, %c0_i32_0 : i32, i32
  }
  func.func @transform_5(%arg0: i32, %arg1: i32) -> (i32, i32, i32) {
    %c0_i32 = arith.constant 0 : i32
    %c0_i32_0 = arith.constant 0 : i32
    return %arg0, %arg1, %c0_i32 : i32, i32, i32
  }
}

</mosaic_0001>

<llo_original>
// kernel: tpu_custom_call.1
$region0: #{tpu_custom_call.1}
  #allocation0 [shape = 'u32[]', space=smem, size = 0x4, offset = 0x4, fixed_abs, tag = 'smem constant byte address 0x4 - core index']
  #allocation1 [shape = 'u32[144,128]{1,0:T(1,128)}', space=vmem, size = 0x12000, scoped, tag = 'internal scratch']
  #allocation2 [shape = 'f32[1]{0:T(128)S(6)}', space=smem, size = 0x200, scoped, tag = 'scoped memory for tpu_custom_call.1']
  %s0 = inlined_call_operand.<no memory space> [shape: f32[1], index: 0, kind: input, shape index: {}]
  %s1 = inlined_call_operand.vmem [shape: f32[2,3,8,128], index: 1, kind: input, shape index: {}]
  %s2 = inlined_call_operand.vmem [shape: bf16[3,128,8], index: 2, kind: input, shape index: {}]
  %s3 = inlined_call_operand.vmem [shape: bf16[32,8], index: 3, kind: input, shape index: {}]
  %s4 = inlined_call_operand.vmem [shape: bf16[8,32], index: 4, kind: input, shape index: {}]
  %s5 = inlined_call_operand.hbm [shape: f32[2,32,32], index: 5, kind: output, shape index: {}]
  %s6 = sld [smem:[#allocation0]]
  $region53: #{tpu_custom_call.1} parent=0
    _
  %s8 = ssub.s32 1, %s6
  %s9 = scalar_select 0, %s8, %s6
  %10 = sst [smem:[#allocation2]] %s0
  $region1: #{tpu_custom_call.1} parent=0
    #allocation3 [shape = 'u8[32768]{0}', space=vmem, size = 0x8000, scoped, tag = 'output window, operand 0']
    #allocation4 [shape = 's32[2]{0}', space=sflag, size = 0x8, scoped, tag = 'scoped memory for tpu_custom_call.1']
    %11 = vsyncpa [#allocation4], 0
    %s12 = scalar_lea.sflag [#allocation4], 1
    %13 = vsyncpa %s12, 0
    loop: start=0, step=1, limit=4
    $region2: #{tpu_custom_call.1} parent=1 // loop_pre_header
      _
    $region3: #{tpu_custom_call.1} parent=1 // loop_header
      %s15 = sphi 0, %s19
      %p16 = scmp.ge.s32.totalorder %s15, 4
      %s22 = sphi 0, %s34
      %s23 = sphi 0, %s30
      %s24 = sphi 0, %s22
      %s25 = sphi 0, %s23
      %s26 = sphi 0, %s24
      %s27 = sphi 0, %s25
      %s35 = sphi 0, %s35
      %s37 = sphi 0, %s35
      %s38 = sphi 0, %s37
      %s52 = sphi 0, %s38
      %s58 = sphi 0, %s60
      %s61 = sphi 0, %s58
      %s62 = sphi 0, %s61
      %s78 = sphi 0, %s62
      %s82 = sphi 0, %s82
      %s84 = sphi 0, %s82
      %s85 = sphi 0, %s84
      %s99 = sphi 0, %s85
      %s105 = sphi 0, %s107
      %s108 = sphi 0, %s105
      %s109 = sphi 0, %s108
      %s125 = sphi 0, %s109
      %s129 = sphi 0, %s129
      %s131 = sphi 0, %s129
      %s132 = sphi 0, %s131
      %s146 = sphi 0, %s132
      %s154 = sphi 0, %s156
      %s157 = sphi 0, %s154
      %s158 = sphi 0, %s157
      %s174 = sphi 0, %s158
    $region4: #{tpu_custom_call.1} parent=1 // loop_header_branch
      %18 = sbr.rel (%p16) target = $region8
    $region5: #{tpu_custom_call.1} parent=1 // loop_body
      %s20 = ssub.s32 %s15, 1
      %s21 = ssub.s32 %s15, 2
      %s28 = sadd.s32 1, %s23
      %p29 = scmp.ge.s32.totalorder %s28, 1
      %s30 = scalar_select %p29, 0, %s28
      %s31 = sadd.s32 1, %s22
      %s32 = scalar_select %p29, %s31, %s22
      %p33 = scmp.ge.s32.totalorder %s32, 2
      %s34 = scalar_select %p33, 0, %s32
      %s36 = sadd.s32 %s35, 1
      %p39 = scmp.eq.s32.totalorder %s15, 1
      %p40 = scmp.ne.s32.totalorder %s35, %s37
      %p41 = scmp.eq.s32.totalorder %s15, 0
      %p42 = por %p40, %p41
      %p43 = scmp.ne.s32.totalorder %s35, %s37
      %p44 = scmp.eq.s32.totalorder %s20, 1
      %p45 = por %p43, %p44
      %p46 = scmp.ne.s32.totalorder %s37, %s38
      %p47 = scmp.eq.s32.totalorder %s20, 0
      %p48 = por %p46, %p47
      %p49 = scmp.ne.s32.totalorder %s37, %s38
      %p50 = scmp.eq.s32.totalorder %s21, 1
      %p51 = por %p49, %p50
      %p53 = scmp.ne.s32.totalorder %s38, %s52
      %p54 = scmp.eq.s32.totalorder %s21, 0
      %p55 = por %p53, %p54
      %s56 = ssub.s32 %s22, %s34
      %p57 = scmp.eq.s32.totalorder %s56, 0
      %s59 = sadd.s32 %s58, 1
      %s60 = scalar_select %p57, %s58, %s59
      %p63 = pneg %p57
      %p64 = scmp.eq.s32.totalorder %s15, 1
      %p65 = por %p63, %p64
      %p66 = scmp.ne.s32.totalorder %s58, %s61
      %p67 = scmp.eq.s32.totalorder %s15, 0
      %p68 = por %p66, %p67
      %p69 = scmp.ne.s32.totalorder %s58, %s61
      %p70 = scmp.eq.s32.totalorder %s20, 1
      %p71 = por %p69, %p70
      %p72 = scmp.ne.s32.totalorder %s61, %s62
      %p73 = scmp.eq.s32.totalorder %s20, 0
      %p74 = por %p72, %p73
      %p75 = scmp.ne.s32.totalorder %s61, %s62
      %p76 = scmp.eq.s32.totalorder %s21, 1
      %p77 = por %p75, %p76
      %p79 = scmp.ne.s32.totalorder %s62, %s78
      %p80 = scmp.eq.s32.totalorder %s21, 0
      %p81 = por %p79, %p80
      %s83 = sadd.s32 %s82, 1
      %p86 = scmp.eq.s32.totalorder %s15, 1
      %p87 = scmp.ne.s32.totalorder %s82, %s84
      %p88 = scmp.eq.s32.totalorder %s15, 0
      %p89 = por %p87, %p88
      %p90 = scmp.ne.s32.totalorder %s82, %s84
      %p91 = scmp.eq.s32.totalorder %s20, 1
      %p92 = por %p90, %p91
      %p93 = scmp.ne.s32.totalorder %s84, %s85
      %p94 = scmp.eq.s32.totalorder %s20, 0
      %p95 = por %p93, %p94
      %p96 = scmp.ne.s32.totalorder %s84, %s85
      %p97 = scmp.eq.s32.totalorder %s21, 1
      %p98 = por %p96, %p97
      %p100 = scmp.ne.s32.totalorder %s85, %s99
      %p101 = scmp.eq.s32.totalorder %s21, 0
      %p102 = por %p100, %p101
      %s103 = ssub.s32 %s23, %s30
      %p104 = scmp.eq.s32.totalorder %s103, 0
      %s106 = sadd.s32 %s105, 1
      %s107 = scalar_select %p104, %s105, %s106
      %p110 = pneg %p104
      %p111 = scmp.eq.s32.totalorder %s15, 1
      %p112 = por %p110, %p111
      %p113 = scmp.ne.s32.totalorder %s105, %s108
      %p114 = scmp.eq.s32.totalorder %s15, 0
      %p115 = por %p113, %p114
      %p116 = scmp.ne.s32.totalorder %s105, %s108
      %p117 = scmp.eq.s32.totalorder %s20, 1
      %p118 = por %p116, %p117
      %p119 = scmp.ne.s32.totalorder %s108, %s109
      %p120 = scmp.eq.s32.totalorder %s20, 0
      %p121 = por %p119, %p120
      %p122 = scmp.ne.s32.totalorder %s108, %s109
      %p123 = scmp.eq.s32.totalorder %s21, 1
      %p124 = por %p122, %p123
      %p126 = scmp.ne.s32.totalorder %s109, %s125
      %p127 = scmp.eq.s32.totalorder %s21, 0
      %p128 = por %p126, %p127
      %s130 = sadd.s32 %s129, 1
      %p133 = scmp.eq.s32.totalorder %s15, 1
      %p134 = scmp.ne.s32.totalorder %s129, %s131
      %p135 = scmp.eq.s32.totalorder %s15, 0
      %p136 = por %p134, %p135
      %p137 = scmp.ne.s32.totalorder %s129, %s131
      %p138 = scmp.eq.s32.totalorder %s20, 1
      %p139 = por %p137, %p138
      %p140 = scmp.ne.s32.totalorder %s131, %s132
      %p141 = scmp.eq.s32.totalorder %s20, 0
      %p142 = por %p140, %p141
      %p143 = scmp.ne.s32.totalorder %s131, %s132
      %p144 = scmp.eq.s32.totalorder %s21, 1
      %p145 = por %p143, %p144
      %p147 = scmp.ne.s32.totalorder %s132, %s146
      %p148 = scmp.eq.s32.totalorder %s21, 0
      %p149 = por %p147, %p148
      %s150 = ssub.s32 %s22, %s34
      %s151 = ssub.s32 %s23, %s30
      %s152 = sor.u32 %s150, %s151
      %p153 = scmp.eq.s32.totalorder %s152, 0
      %s155 = sadd.s32 %s154, 1
      %s156 = scalar_select %p153, %s154, %s155
      %p159 = pneg %p153
      %p160 = scmp.eq.s32.totalorder %s15, 1
      %p161 = por %p159, %p160
      %p162 = scmp.ne.s32.totalorder %s154, %s157
      %p163 = scmp.eq.s32.totalorder %s15, 0
      %p164 = por %p162, %p163
      %p165 = scmp.ne.s32.totalorder %s154, %s157
      %p166 = scmp.eq.s32.totalorder %s20, 1
      %p167 = por %p165, %p166
      %p168 = scmp.ne.s32.totalorder %s157, %s158
      %p169 = scmp.eq.s32.totalorder %s20, 0
      %p170 = por %p168, %p169
      %p171 = scmp.ne.s32.totalorder %s157, %s158
      %p172 = scmp.eq.s32.totalorder %s21, 1
      %p173 = por %p171, %p172
      %p175 = scmp.ne.s32.totalorder %s158, %s174
      %p176 = scmp.eq.s32.totalorder %s21, 0
      %p177 = por %p175, %p176
      %p178 = scmp.le.s32.totalorder 1, %s15
      %p179 = scmp.lt.s32.totalorder %s15, 3
      %p180 = pnand %p178, %p179
      %p181 = pneg %p180
      // Predicated region
      $region9: #{tpu_custom_call.1} parent=5 // pred_check
        _
      $region10: #{tpu_custom_call.1} parent=5 // pred_check_branch
        %183 = sbr.rel (%p180) target = $region12
      $region11: #{tpu_custom_call.1} parent=5 // pred_region
        %s184 = ssub.s32 %s15, 1
        // Predicated region
        $region13: #{tpu_custom_call.1} parent=11 // pred_check
          %p185 = pneg %p48
        $region14: #{tpu_custom_call.1} parent=11 // pred_check_branch
          %187 = sbr.rel (%p185) target = $region16
        $region15: #{tpu_custom_call.1} parent=11 // pred_region
          _
        $region16: #{tpu_custom_call.1} parent=11 // pred_fallthru
          _
        // Predicated region
        $region17: #{tpu_custom_call.1} parent=11 // pred_check
          %p188 = pneg %p95
        $region18: #{tpu_custom_call.1} parent=11 // pred_check_branch
          %190 = sbr.rel (%p188) target = $region20
        $region19: #{tpu_custom_call.1} parent=11 // pred_region
          _
        $region20: #{tpu_custom_call.1} parent=11 // pred_fallthru
          _
        // Predicated region
        $region21: #{tpu_custom_call.1} parent=11 // pred_check
          %p191 = pneg %p121
        $region22: #{tpu_custom_call.1} parent=11 // pred_check_branch
          %193 = sbr.rel (%p191) target = $region24
        $region23: #{tpu_custom_call.1} parent=11 // pred_region
          %s194 = smul.u32 4, %s25
          %p195 = scmp.lt.s32.totalorder %s194, 3
          %s196 = scalar_select %p195, %s194, 3
          %s197 = smul.addr %s196, 4
          %s198 = scalar_lea.vmem %s3, %s197
          %s199 = smul.u32 4, %s25
        $region24: #{tpu_custom_call.1} parent=11 // pred_fallthru
          _
        // Predicated region
        $region25: #{tpu_custom_call.1} parent=11 // pred_check
          %p200 = pneg %p142
        $region26: #{tpu_custom_call.1} parent=11 // pred_check_branch
          %202 = sbr.rel (%p200) target = $region28
        $region27: #{tpu_custom_call.1} parent=11 // pred_region
          _
        $region28: #{tpu_custom_call.1} parent=11 // pred_fallthru
          _
      $region12: #{tpu_custom_call.1} parent=5 // pred_fallthru
        _
      %p203 = scmp.lt.s32.totalorder %s15, 2
      // Predicated region
      $region29: #{tpu_custom_call.1} parent=5 // pred_check
        %p204 = pneg %p203
      $region30: #{tpu_custom_call.1} parent=5 // pred_check_branch
        %206 = sbr.rel (%p204) target = $region32
      $region31: #{tpu_custom_call.1} parent=5 // pred_region
        // Predicated region
        $region33: #{tpu_custom_call.1} parent=31 // pred_check
          %p207 = pneg %p68
        $region34: #{tpu_custom_call.1} parent=31 // pred_check_branch
          %209 = sbr.rel (%p207) target = $region36
        $region35: #{tpu_custom_call.1} parent=31 // pred_region
          %p210 = scmp.lt.s32.totalorder %s22, 1
          %s211 = scalar_select %p210, %s22, 1
          %s212 = smul.addr %s211, 3
          %s213 = smul.addr %s212, 8
          %s214 = scalar_lea.vmem %s1, %s213
        $region36: #{tpu_custom_call.1} parent=31 // pred_fallthru
          _
      $region32: #{tpu_custom_call.1} parent=5 // pred_fallthru
        _
      %p215 = scmp.le.s32.totalorder 1, %s15
      %p216 = scmp.lt.s32.totalorder %s15, 3
      %p217 = pnand %p215, %p216
      %p218 = pneg %p217
      // Predicated region
      $region37: #{tpu_custom_call.1} parent=5 // pred_check
        _
      $region38: #{tpu_custom_call.1} parent=5 // pred_check_branch
        %220 = sbr.rel (%p217) target = $region40
      $region39: #{tpu_custom_call.1} parent=5 // pred_region
        %s221 = ssub.s32 %s15, 1
        %p222 = pneg %p48
        %p223 = pneg %p45
        %p224 = scmp.lt.s32.totalorder %s24, 1
        %s225 = scalar_select %p224, %s24, 1
        %s226 = smul.addr %s225, 3
        %s227 = smul.addr %s226, 8
        %s228 = scalar_lea.vmem %s1, %s227
        %p229 = pneg %p74
        %p230 = pneg %p71
        %p231 = pneg %p95
        %p232 = pneg %p92
        %s233 = smul.u32 4, %s25
        %p234 = scmp.lt.s32.totalorder %s233, 3
        %s235 = scalar_select %p234, %s233, 3
        %s236 = smul.addr %s235, 4
        %s237 = scalar_lea.vmem %s3, %s236
        %p238 = pneg %p121
        %p239 = pneg %p118
        %p240 = pneg %p142
        %p241 = pneg %p139
        %p242 = pneg %p170
        %p243 = pneg %p167
        %s244 = sand.u32 %s157, 1
        %s245 = scalar_lea.sflag [#allocation4], %s244
        %s246 = sand.u32 %s157, 1
        %s247 = smul.addr %s246, 32
        %s248 = scalar_lea.vmem [#allocation3], %s247
        %p249 = scmp.lt.s32.totalorder %s24, 1
        %s250 = scalar_select %p249, %s24, 1
        %s251 = smul.addr %s250, 3
        %s252 = smul.addr %s251, 8
        %s253 = scalar_lea.vmem %s1, %s252
        %s254 = smul.u32 4, %s25
        %p255 = scmp.lt.s32.totalorder %s254, 3
        %s256 = scalar_select %p255, %s254, 3
        %s257 = smul.addr %s256, 4
        %s258 = scalar_lea.vmem %s3, %s257
        %s259 = smul.u32 4, %s25
        %s260 = smul.u32 4, %s25
        %v262 = vld [vmem:[%s253] sm:$0xff]
        %v263 = vpack.c.bf16 %v262, %v262
        %v264 = vld [vmem:[%s2] sm:$0xf]
        %v265 = vld [vmem:[%s2 + $0x4] sm:$0xf]
        %v266 = vld [vmem:[%s2 + $0x8] sm:$0xf]
        %v267 = vld [vmem:[%s2 + $0xc] sm:$0xf]
        %v268 = vld [vmem:[%s2 + $0x10] sm:$0xf]
        %v269 = vld [vmem:[%s2 + $0x14] sm:$0xf]
        %v270 = vld [vmem:[%s2 + $0x18] sm:$0xf]
        %v271 = vld [vmem:[%s2 + $0x1c] sm:$0xf]
        %v272 = vld [vmem:[%s2 + $0x20] sm:$0xf]
        %v273 = vld [vmem:[%s2 + $0x24] sm:$0xf]
        %v274 = vld [vmem:[%s2 + $0x28] sm:$0xf]
        %v275 = vld [vmem:[%s2 + $0x2c] sm:$0xf]
        %v276 = vld [vmem:[%s2 + $0x30] sm:$0xf]
        %v277 = vld [vmem:[%s2 + $0x34] sm:$0xf]
        %v278 = vld [vmem:[%s2 + $0x38] sm:$0xf]
        %v279 = vld [vmem:[%s2 + $0x3c] sm:$0xf]
        %s280 = scalar_lea.vmem %s253, 8
        %v281 = vld [vmem:[%s280] sm:$0xff]
        %v282 = vpack.c.bf16 %v281, %v281
        %s283 = scalar_lea.vmem %s2, 64
        %v284 = vld [vmem:[%s283] sm:$0xf]
        %v285 = vld [vmem:[%s283 + $0x4] sm:$0xf]
        %v286 = vld [vmem:[%s283 + $0x8] sm:$0xf]
        %v287 = vld [vmem:[%s283 + $0xc] sm:$0xf]
        %v288 = vld [vmem:[%s283 + $0x10] sm:$0xf]
        %v289 = vld [vmem:[%s283 + $0x14] sm:$0xf]
        %v290 = vld [vmem:[%s283 + $0x18] sm:$0xf]
        %v291 = vld [vmem:[%s283 + $0x1c] sm:$0xf]
        %v292 = vld [vmem:[%s283 + $0x20] sm:$0xf]
        %v293 = vld [vmem:[%s283 + $0x24] sm:$0xf]
        %v294 = vld [vmem:[%s283 + $0x28] sm:$0xf]
        %v295 = vld [vmem:[%s283 + $0x2c] sm:$0xf]
        %v296 = vld [vmem:[%s283 + $0x30] sm:$0xf]
        %v297 = vld [vmem:[%s283 + $0x34] sm:$0xf]
        %v298 = vld [vmem:[%s283 + $0x38] sm:$0xf]
        %v299 = vld [vmem:[%s283 + $0x3c] sm:$0xf]
        %v316 = vunpack.c.l.b16 %v284
        %v317 = vunpack.c.l.b16 %v285
        %v318 = vunpack.c.l.b16 %v286
        %v319 = vunpack.c.l.b16 %v287
        %v320 = vunpack.c.l.b16 %v288
        %v321 = vunpack.c.l.b16 %v289
        %v322 = vunpack.c.l.b16 %v290
        %v323 = vunpack.c.l.b16 %v291
        %v324 = vunpack.c.l.b16 %v292
        %v325 = vunpack.c.l.b16 %v293
        %v326 = vunpack.c.l.b16 %v294
        %v327 = vunpack.c.l.b16 %v295
        %v328 = vunpack.c.l.b16 %v296
        %v329 = vunpack.c.l.b16 %v297
        %v330 = vunpack.c.l.b16 %v298
        %v331 = vunpack.c.l.b16 %v299
        %v332 = vpack.c.b16 %v317, %v316
        %v333 = vpack.c.b16 %v319, %v318
        %v334 = vpack.c.b16 %v321, %v320
        %v335 = vpack.c.b16 %v323, %v322
        %v336 = vpack.c.b16 %v325, %v324
        %v337 = vpack.c.b16 %v327, %v326
        %v338 = vpack.c.b16 %v329, %v328
        %v339 = vpack.c.b16 %v331, %v330
        %348 = vmatprep.subr.bf16.mxu0 0
        %349 = vmatpush1.bf16.msra.mxu0 %v332
        %350 = vmatprep.subr.bf16.mxu0 0
        %351 = vmatpush1.bf16.msra.mxu0 %v333
        %352 = vmatprep.subr.bf16.mxu0 0
        %353 = vmatpush1.bf16.msra.mxu0 %v334
        %354 = vmatprep.subr.bf16.mxu0 0
        %355 = vmatpush1.bf16.msra.mxu0 %v335
        %356 = vmatprep.subr.bf16.mxu0 0
        %357 = vmatpush1.bf16.msra.mxu0 %v336
        %358 = vmatprep.subr.bf16.mxu0 0
        %359 = vmatpush1.bf16.msra.mxu0 %v337
        %360 = vmatprep.subr.bf16.mxu0 0
        %361 = vmatpush1.bf16.msra.mxu0 %v338
        %362 = vmatprep.subr.bf16.mxu0 0
        %363 = vmatpush1.bf16.msra.mxu0 %v339
        %364 = vmatprep.subr.bf16.mxu0 0
        %365 = vmatpush1.bf16.msra.mxu0 0
        %366 = vmatprep.subr.bf16.mxu0 0
        %367 = vmatpush1.bf16.msra.mxu0 0
        %368 = vmatprep.subr.bf16.mxu0 0
        %369 = vmatpush1.bf16.msra.mxu0 0
        %370 = vmatprep.subr.bf16.mxu0 0
        %371 = vmatpush1.bf16.msra.mxu0 0
        %372 = vmatprep.subr.bf16.mxu0 0
        %373 = vmatpush1.bf16.msra.mxu0 0
        %374 = vmatprep.subr.bf16.mxu0 0
        %375 = vmatpush1.bf16.msra.mxu0 0
        %376 = vmatprep.subr.bf16.mxu0 0
        %377 = vmatpush1.bf16.msra.mxu0 0
        %378 = vmatprep.subr.bf16.mxu0 0
        %379 = vmatpush1.bf16.msra.mxu0 0
        %380 = vmatprep.mubr.bf16.mxu0 0
        %381 = vmatmul.mubr.bf16.gmra.mrb[0].mxu0 %v282
        %v382 = vpop.f32.mrb[0].mxu0
        %v383 = vadd.f32 0.0, %v382
        %v384 = vpop.f32.mrb[0].mxu0
        %v385 = vpop.f32.mrb[0].mxu0
        %v386 = vpop.f32.mrb[0].mxu0
        %387 = vdwg.mxu0
        %v404 = vunpack.c.l.b16 %v264
        %v405 = vunpack.c.l.b16 %v265
        %v406 = vunpack.c.l.b16 %v266
        %v407 = vunpack.c.l.b16 %v267
        %v408 = vunpack.c.l.b16 %v268
        %v409 = vunpack.c.l.b16 %v269
        %v410 = vunpack.c.l.b16 %v270
        %v411 = vunpack.c.l.b16 %v271
        %v412 = vunpack.c.l.b16 %v272
        %v413 = vunpack.c.l.b16 %v273
        %v414 = vunpack.c.l.b16 %v274
        %v415 = vunpack.c.l.b16 %v275
        %v416 = vunpack.c.l.b16 %v276
        %v417 = vunpack.c.l.b16 %v277
        %v418 = vunpack.c.l.b16 %v278
        %v419 = vunpack.c.l.b16 %v279
        %v420 = vpack.c.b16 %v405, %v404
        %v421 = vpack.c.b16 %v407, %v406
        %v422 = vpack.c.b16 %v409, %v408
        %v423 = vpack.c.b16 %v411, %v410
        %v424 = vpack.c.b16 %v413, %v412
        %v425 = vpack.c.b16 %v415, %v414
        %v426 = vpack.c.b16 %v417, %v416
        %v427 = vpack.c.b16 %v419, %v418
        %436 = vmatprep.subr.bf16.mxu0 0
        %437 = vmatpush1.bf16.msra.mxu0 %v420
        %438 = vmatprep.subr.bf16.mxu0 0
        %439 = vmatpush1.bf16.msra.mxu0 %v421
        %440 = vmatprep.subr.bf16.mxu0 0
        %441 = vmatpush1.bf16.msra.mxu0 %v422
        %442 = vmatprep.subr.bf16.mxu0 0
        %443 = vmatpush1.bf16.msra.mxu0 %v423
        %444 = vmatprep.subr.bf16.mxu0 0
        %445 = vmatpush1.bf16.msra.mxu0 %v424
        %446 = vmatprep.subr.bf16.mxu0 0
        %447 = vmatpush1.bf16.msra.mxu0 %v425
        %448 = vmatprep.subr.bf16.mxu0 0
        %449 = vmatpush1.bf16.msra.mxu0 %v426
        %450 = vmatprep.subr.bf16.mxu0 0
        %451 = vmatpush1.bf16.msra.mxu0 %v427
        %452 = vmatprep.subr.bf16.mxu0 0
        %453 = vmatpush1.bf16.msra.mxu0 0
        %454 = vmatprep.subr.bf16.mxu0 0
        %455 = vmatpush1.bf16.msra.mxu0 0
        %456 = vmatprep.subr.bf16.mxu0 0
        %457 = vmatpush1.bf16.msra.mxu0 0
        %458 = vmatprep.subr.bf16.mxu0 0
        %459 = vmatpush1.bf16.msra.mxu0 0
        %460 = vmatprep.subr.bf16.mxu0 0
        %461 = vmatpush1.bf16.msra.mxu0 0
        %462 = vmatprep.subr.bf16.mxu0 0
        %463 = vmatpush1.bf16.msra.mxu0 0
        %464 = vmatprep.subr.bf16.mxu0 0
        %465 = vmatpush1.bf16.msra.mxu0 0
        %466 = vmatprep.subr.bf16.mxu0 0
        %467 = vmatpush1.bf16.msra.mxu0 0
        %468 = vmatprep.mubr.bf16.mxu0 0
        %469 = vmatmul.mubr.bf16.gmra.mrb[0].mxu0 %v263
        %v470 = vpop.f32.mrb[0].mxu0
        %v471 = vadd.f32 %v383, %v470
        %v472 = vpop.f32.mrb[0].mxu0
        %v473 = vpop.f32.mrb[0].mxu0
        %v474 = vpop.f32.mrb[0].mxu0
        %475 = vdwg.mxu0
        %s476 = scalar_lea.vmem %s253, 16
        %v477 = vld [vmem:[%s476] sm:$0xff]
        %v478 = vpack.c.bf16 %v477, %v477
        %s479 = scalar_lea.vmem %s2, 128
        %v480 = vld [vmem:[%s479] sm:$0xf]
        %v481 = vld [vmem:[%s479 + $0x4] sm:$0xf]
        %v482 = vld [vmem:[%s479 + $0x8] sm:$0xf]
        %v483 = vld [vmem:[%s479 + $0xc] sm:$0xf]
        %v484 = vld [vmem:[%s479 + $0x10] sm:$0xf]
        %v485 = vld [vmem:[%s479 + $0x14] sm:$0xf]
        %v486 = vld [vmem:[%s479 + $0x18] sm:$0xf]
        %v487 = vld [vmem:[%s479 + $0x1c] sm:$0xf]
        %v488 = vld [vmem:[%s479 + $0x20] sm:$0xf]
        %v489 = vld [vmem:[%s479 + $0x24] sm:$0xf]
        %v490 = vld [vmem:[%s479 + $0x28] sm:$0xf]
        %v491 = vld [vmem:[%s479 + $0x2c] sm:$0xf]
        %v492 = vld [vmem:[%s479 + $0x30] sm:$0xf]
        %v493 = vld [vmem:[%s479 + $0x34] sm:$0xf]
        %v494 = vld [vmem:[%s479 + $0x38] sm:$0xf]
        %v495 = vld [vmem:[%s479 + $0x3c] sm:$0xf]
        %v512 = vunpack.c.l.b16 %v480
        %v513 = vunpack.c.l.b16 %v481
        %v514 = vunpack.c.l.b16 %v482
        %v515 = vunpack.c.l.b16 %v483
        %v516 = vunpack.c.l.b16 %v484
        %v517 = vunpack.c.l.b16 %v485
        %v518 = vunpack.c.l.b16 %v486
        %v519 = vunpack.c.l.b16 %v487
        %v520 = vunpack.c.l.b16 %v488
        %v521 = vunpack.c.l.b16 %v489
        %v522 = vunpack.c.l.b16 %v490
        %v523 = vunpack.c.l.b16 %v491
        %v524 = vunpack.c.l.b16 %v492
        %v525 = vunpack.c.l.b16 %v493
        %v526 = vunpack.c.l.b16 %v494
        %v527 = vunpack.c.l.b16 %v495
        %v528 = vpack.c.b16 %v513, %v512
        %v529 = vpack.c.b16 %v515, %v514
        %v530 = vpack.c.b16 %v517, %v516
        %v531 = vpack.c.b16 %v519, %v518
        %v532 = vpack.c.b16 %v521, %v520
        %v533 = vpack.c.b16 %v523, %v522
        %v534 = vpack.c.b16 %v525, %v524
        %v535 = vpack.c.b16 %v527, %v526
        %544 = vmatprep.subr.bf16.mxu0 0
        %545 = vmatpush1.bf16.msra.mxu0 %v528
        %546 = vmatprep.subr.bf16.mxu0 0
        %547 = vmatpush1.bf16.msra.mxu0 %v529
        %548 = vmatprep.subr.bf16.mxu0 0
        %549 = vmatpush1.bf16.msra.mxu0 %v530
        %550 = vmatprep.subr.bf16.mxu0 0
        %551 = vmatpush1.bf16.msra.mxu0 %v531
        %552 = vmatprep.subr.bf16.mxu0 0
        %553 = vmatpush1.bf16.msra.mxu0 %v532
        %554 = vmatprep.subr.bf16.mxu0 0
        %555 = vmatpush1.bf16.msra.mxu0 %v533
        %556 = vmatprep.subr.bf16.mxu0 0
        %557 = vmatpush1.bf16.msra.mxu0 %v534
        %558 = vmatprep.subr.bf16.mxu0 0
        %559 = vmatpush1.bf16.msra.mxu0 %v535
        %560 = vmatprep.subr.bf16.mxu0 0
        %561 = vmatpush1.bf16.msra.mxu0 0
        %562 = vmatprep.subr.bf16.mxu0 0
        %563 = vmatpush1.bf16.msra.mxu0 0
        %564 = vmatprep.subr.bf16.mxu0 0
        %565 = vmatpush1.bf16.msra.mxu0 0
        %566 = vmatprep.subr.bf16.mxu0 0
        %567 = vmatpush1.bf16.msra.mxu0 0
        %568 = vmatprep.subr.bf16.mxu0 0
        %569 = vmatpush1.bf16.msra.mxu0 0
        %570 = vmatprep.subr.bf16.mxu0 0
        %571 = vmatpush1.bf16.msra.mxu0 0
        %572 = vmatprep.subr.bf16.mxu0 0
        %573 = vmatpush1.bf16.msra.mxu0 0
        %574 = vmatprep.subr.bf16.mxu0 0
        %575 = vmatpush1.bf16.msra.mxu0 0
        %576 = vmatprep.mubr.bf16.mxu0 0
        %577 = vmatmul.mubr.bf16.gmra.mrb[0].mxu0 %v478
        %v578 = vpop.f32.mrb[0].mxu0
        %v579 = vadd.f32 0.0, %v578
        %v580 = vpop.f32.mrb[0].mxu0
        %v581 = vpop.f32.mrb[0].mxu0
        %v582 = vpop.f32.mrb[0].mxu0
        %583 = vdwg.mxu0
        %v584 = vadd.f32 %v471, %v579
        %v585 = vld [vmem:[%s258] sm:$0xf]
        %v586 = vld [vmem:[%s258 + $0x4] sm:$0xf]
        %v587 = vld [vmem:[%s258 + $0x8] sm:$0xf]
        %v588 = vld [vmem:[%s258 + $0xc] sm:$0xf]
        %v589 = vpack.c.bf16 %v584, %v584
        %v594 = vunpack.c.l.b16 %v585
        %v595 = vunpack.c.l.b16 %v586
        %v596 = vunpack.c.l.b16 %v587
        %v597 = vunpack.c.l.b16 %v588
        %v598 = vpack.c.b16 %v595, %v594
        %v599 = vpack.c.b16 %v597, %v596
        %vm600 = vcmask 64512
        %v602 = vsel %vm600, %v598, 0
        %v605 = vsel %vm600, %v599, 0
        %vm607 = vcmask 1043456
        %v609 = vsel %vm607, %v589, 0
        %611 = vmatprep.subr.bf16.mxu0 0
        %612 = vmatpush1.bf16.msra.mxu0 %v609
        %613 = vmatprep.subr.bf16.mxu0 0
        %614 = vmatpush1.bf16.msra.mxu0 0
        %615 = vmatprep.subr.bf16.mxu0 0
        %616 = vmatpush1.bf16.msra.mxu0 0
        %617 = vmatprep.subr.bf16.mxu0 0
        %618 = vmatpush1.bf16.msra.mxu0 0
        %619 = vmatprep.subr.bf16.mxu0 0
        %620 = vmatpush1.bf16.msra.mxu0 0
        %621 = vmatprep.subr.bf16.mxu0 0
        %622 = vmatpush1.bf16.msra.mxu0 0
        %623 = vmatprep.subr.bf16.mxu0 0
        %624 = vmatpush1.bf16.msra.mxu0 0
        %625 = vmatprep.subr.bf16.mxu0 0
        %626 = vmatpush1.bf16.msra.mxu0 0
        %627 = vmatprep.subr.bf16.mxu0 0
        %628 = vmatpush1.bf16.msra.mxu0 0
        %629 = vmatprep.subr.bf16.mxu0 0
        %630 = vmatpush1.bf16.msra.mxu0 0
        %631 = vmatprep.subr.bf16.mxu0 0
        %632 = vmatpush1.bf16.msra.mxu0 0
        %633 = vmatprep.subr.bf16.mxu0 0
        %634 = vmatpush1.bf16.msra.mxu0 0
        %635 = vmatprep.subr.bf16.mxu0 0
        %636 = vmatpush1.bf16.msra.mxu0 0
        %637 = vmatprep.subr.bf16.mxu0 0
        %638 = vmatpush1.bf16.msra.mxu0 0
        %639 = vmatprep.subr.bf16.mxu0 0
        %640 = vmatpush1.bf16.msra.mxu0 0
        %641 = vmatprep.subr.bf16.mxu0 0
        %642 = vmatpush1.bf16.msra.mxu0 0
        %643 = vmatprep.mubr.bf16.mxu0 0
        %644 = vmatmul.mubr.bf16.gmra.mrb[0].mxu0 %v602
        %v645 = vpop.f32.mrb[0].mxu0
        %v646 = vadd.f32 0.0, %v645
        %v647 = vpop.f32.mrb[0].mxu0
        %v648 = vpop.f32.mrb[0].mxu0
        %v649 = vadd.f32 0.0, %v648
        %v650 = vpop.f32.mrb[0].mxu0
        %651 = vmatprep.mubr.bf16.mxu0 0
        %652 = vmatmul.mubr.bf16.gmra.mrb[0].mxu0 %v605
        %v653 = vpop.f32.mrb[0].mxu0
        %v654 = vadd.f32 0.0, %v653
        %v655 = vpop.f32.mrb[0].mxu0
        %v656 = vpop.f32.mrb[0].mxu0
        %v657 = vadd.f32 0.0, %v656
        %v658 = vpop.f32.mrb[0].mxu0
        %659 = vdwg.mxu0
        %v660 = vpack.c.bf16 %v649, %v646
        %v661 = vpack.c.bf16 %v657, %v654
        %v662 = vld [vmem:[%s4] sm:$0xf]
        %s663 = sld [smem:[#allocation2]]
        %v664 = vstv %s663
        %v666 = vsel %vm600, %v660, 0
        %v669 = vsel %vm600, %v661, 0
        %v672 = vsel %vm607, %v662, 0
        %674 = vmatprep.subr.bf16.mxu0 0
        %675 = vmatpush1.bf16.msra.mxu0 %v672
        %676 = vmatprep.subr.bf16.mxu0 0
        %677 = vmatpush1.bf16.msra.mxu0 0
        %678 = vmatprep.subr.bf16.mxu0 0
        %679 = vmatpush1.bf16.msra.mxu0 0
        %680 = vmatprep.subr.bf16.mxu0 0
        %681 = vmatpush1.bf16.msra.mxu0 0
        %682 = vmatprep.subr.bf16.mxu0 0
        %683 = vmatpush1.bf16.msra.mxu0 0
        %684 = vmatprep.subr.bf16.mxu0 0
        %685 = vmatpush1.bf16.msra.mxu0 0
        %686 = vmatprep.subr.bf16.mxu0 0
        %687 = vmatpush1.bf16.msra.mxu0 0
        %688 = vmatprep.subr.bf16.mxu0 0
        %689 = vmatpush1.bf16.msra.mxu0 0
        %690 = vmatprep.subr.bf16.mxu0 0
        %691 = vmatpush1.bf16.msra.mxu0 0
        %692 = vmatprep.subr.bf16.mxu0 0
        %693 = vmatpush1.bf16.msra.mxu0 0
        %694 = vmatprep.subr.bf16.mxu0 0
        %695 = vmatpush1.bf16.msra.mxu0 0
        %696 = vmatprep.subr.bf16.mxu0 0
        %697 = vmatpush1.bf16.msra.mxu0 0
        %698 = vmatprep.subr.bf16.mxu0 0
        %699 = vmatpush1.bf16.msra.mxu0 0
        %700 = vmatprep.subr.bf16.mxu0 0
        %701 = vmatpush1.bf16.msra.mxu0 0
        %702 = vmatprep.subr.bf16.mxu0 0
        %703 = vmatpush1.bf16.msra.mxu0 0
        %704 = vmatprep.subr.bf16.mxu0 0
        %705 = vmatpush1.bf16.msra.mxu0 0
        %706 = vmatprep.mubr.bf16.mxu0 0
        %707 = vmatmul.mubr.bf16.gmra.mrb[0].mxu0 %v666
        %v708 = vpop.f32.mrb[0].mxu0
        %v709 = vadd.f32 %v664, %v708
        %v710 = vpop.f32.mrb[0].mxu0
        %v711 = vpop.f32.mrb[0].mxu0
        %v712 = vadd.f32 %v664, %v711
        %v713 = vpop.f32.mrb[0].mxu0
        %714 = vmatprep.mubr.bf16.mxu0 0
        %715 = vmatmul.mubr.bf16.gmra.mrb[0].mxu0 %v669
        %v716 = vpop.f32.mrb[0].mxu0
        %v717 = vadd.f32 %v664, %v716
        %v718 = vpop.f32.mrb[0].mxu0
        %v719 = vpop.f32.mrb[0].mxu0
        %v720 = vadd.f32 %v664, %v719
        %v721 = vpop.f32.mrb[0].mxu0
        %722 = vdwg.mxu0
        %v723 = vxor.u32 %v709, 2147483648
        %v724 = vxor.u32 %v712, 2147483648
        %v725 = vxor.u32 %v717, 2147483648
        %v726 = vxor.u32 %v720, 2147483648
        %v727 = vmul.f32 %v723, 1.442695
        %v728 = vpow.pop %v727
        %v729 = vmul.f32 %v724, 1.442695
        %v730 = vpow.pop %v729
        %v731 = vmul.f32 %v725, 1.442695
        %v732 = vpow.pop %v731
        %v733 = vmul.f32 %v726, 1.442695
        %v734 = vpow.pop %v733
        %v735 = vadd.f32 %v728, 1.0
        %v736 = vadd.f32 %v730, 1.0
        %v737 = vadd.f32 %v732, 1.0
        %v738 = vadd.f32 %v734, 1.0
        %v739 = vrcp.pop %v735
        %v740 = vmul.f32 1.0, %v739
        %v741 = vrcp.pop %v736
        %v742 = vmul.f32 1.0, %v741
        %v743 = vrcp.pop %v737
        %v744 = vmul.f32 1.0, %v743
        %v745 = vrcp.pop %v738
        %v746 = vmul.f32 1.0, %v745
        %vm747 = vcmask 261120
        %748 = vst.msk [vmem:[%s248] sm:$0xff] %vm747, %v740
        %749 = vst.msk [vmem:[%s248 + $0x8] sm:$0xff] %vm747, %v742
        %750 = vst.msk [vmem:[%s248 + $0x10] sm:$0xff] %vm747, %v744
        %751 = vst.msk [vmem:[%s248 + $0x18] sm:$0xff] %vm747, %v746
        %s752 = sand.u32 %s157, 1
        %s753 = scalar_lea.sflag [#allocation4], %s752
        %s754 = sand.u32 %s157, 1
        %s755 = smul.addr %s754, 32
        %s756 = scalar_lea.vmem [#allocation3], %s755
        // Predicated region
        $region41: #{tpu_custom_call.1} parent=39 // pred_check
          %p757 = pneg %p167
        $region42: #{tpu_custom_call.1} parent=39 // pred_check_branch
          %759 = sbr.rel (%p757) target = $region44
        $region43: #{tpu_custom_call.1} parent=39 // pred_region
          %s760 = smul.u32 4, %s25
          %s762 = ssub.s32 512, 512
          %763 = vsyncadd %s753, %s762
          %s764 = smul.addr %s24, 4
          %s765 = sadd.s32 %s760, %s764
          %s766 = smul.addr %s765, 128
          %s767 = scalar_lea.hbm %s5, %s766
          %s768 = sshll.u32 %s756, 4
          %s769 = int_to_ptr.vmem [resolvable:$true] %s768
          %774 = dma.vmem_to_hbm [thread:$0]  %s769, 512, %s767, %s753, 128, 128, 8
        $region44: #{tpu_custom_call.1} parent=39 // pred_fallthru
          _
      $region40: #{tpu_custom_call.1} parent=5 // pred_fallthru
        _
      %p775 = scmp.le.s32.totalorder 2, %s15
      // Predicated region
      $region45: #{tpu_custom_call.1} parent=5 // pred_check
        %p776 = pneg %p775
      $region46: #{tpu_custom_call.1} parent=5 // pred_check_branch
        %778 = sbr.rel (%p776) target = $region48
      $region47: #{tpu_custom_call.1} parent=5 // pred_region
        %s779 = ssub.s32 %s15, 2
        // Predicated region
        $region49: #{tpu_custom_call.1} parent=47 // pred_check
          %p780 = pneg %p173
        $region50: #{tpu_custom_call.1} parent=47 // pred_check_branch
          %782 = sbr.rel (%p780) target = $region52
        $region51: #{tpu_custom_call.1} parent=47 // pred_region
          %s783 = sand.u32 %s158, 1
          %s784 = scalar_lea.sflag [#allocation4], %s783
          %s785 = sand.u32 %s158, 1
          %s786 = smul.addr %s785, 32
          %s787 = scalar_lea.vmem [#allocation3], %s786
          %788 = dma.done %s784, 512
        $region52: #{tpu_custom_call.1} parent=47 // pred_fallthru
          _
      $region48: #{tpu_custom_call.1} parent=5 // pred_fallthru
        _
    $region6: #{tpu_custom_call.1} parent=1 // loop_footer
      %s19 = sadd.s32 1, %s15
    $region7: #{tpu_custom_call.1} parent=1 // loop_footer_branch
      %14 = sbr.rel target = $region3
    $region8: #{tpu_custom_call.1} parent=1 // loop_exit
      _
    %789 = vsyncpa [#allocation4], 1
    %s790 = scalar_lea.sflag [#allocation4], 1
    %791 = vsyncpa %s790, 1

</llo_original>
